<compile_context>
chip_gen: v7x
topology: tpu7x:2x2x1
jax: 0.10.0
libtpu: 0.0.40
codegen_flags: <defaults>
</compile_context>

<pallas_src>
import functools

import jax
import jax.numpy as jnp
import numpy as np
from jax.experimental import pallas as pl
from jax.experimental.pallas import tpu as pltpu

EPS = 1e-7
TEMP = 0.1


# -----------------------------------------------------------------------------
# Helpers
# -----------------------------------------------------------------------------
def _block_diag4(mats):
    """Stack 4 (a, b) matrices into one (4a, 4b) block-diagonal matrix."""
    a, b = mats.shape[1], mats.shape[2]
    out = jnp.zeros((4 * a, 4 * b), mats.dtype)
    for g in range(4):
        out = out.at[g * a:(g + 1) * a, g * b:(g + 1) * b].set(mats[g])
    return out


def _pick_time_chunk(S):
    """Largest of (4, 2, 1) dividing S — number of steps packed per hn store."""
    for tc in (4, 2, 1):
        if S % tc == 0:
            return tc
    return 1


# -----------------------------------------------------------------------------
# Pallas kernel: fused stochastic-LSTM forward (input projection + recurrence)
# -----------------------------------------------------------------------------
def _make_lstm_kernel(S, B, I, H, TC, masked, out_dtype):
    """Build the kernel for static (S, B, I, H, TC) and a static `masked` flag."""

    def kernel(*refs):
        if masked:
            (x_ref, zx_ref, zh_ref, wblk_ref, ublk_ref, b_ref,
             hn_ref, hT_ref, cT_ref) = refs
        else:
            (x_ref, wblk_ref, ublk_ref, b_ref,
             hn_ref, hT_ref, cT_ref) = refs

        # ---- input-side projection for ALL time steps at once ---------------
        # x_ref: (S*B, I)  (row r = time r//B, batch r%B)
        x2 = x_ref[...].astype(jnp.float32)
        xcat = jnp.concatenate([x2, x2, x2, x2], axis=-1)          # (S*B, 4I)
        if masked:
            # zx is time-invariant: broadcast the (B, 4I) mask in-kernel
            # instead of shipping an S-fold tiled copy through HBM.
            zx_full = jnp.concatenate([zx_ref[...]] * S, axis=0)   # (S*B, 4I)
            xcat = xcat * zx_full
        # One bf16 MXU matmul: (S*B, 4I) @ block-diag(4I, 4H) -> (S*B, 4H) f32
        xproj = jnp.dot(xcat.astype(jnp.bfloat16), wblk_ref[...],
                        preferred_element_type=jnp.float32) + b_ref[...]

        ublk = ublk_ref[...]                             # (4H, 4H) bf16, hoisted
        zh = zh_ref[...] if masked else None             # (B, 4H)  f32, hoisted

        h = jnp.zeros((B, H), jnp.float32)
        c = jnp.zeros((B, H), jnp.float32)

        # ---- serial recurrence: one lane-dense (B, 4H) matmul per step -------
        # TC steps are packed per lane-dense (B, TC*H) hn store.
        for q in range(S // TC):                    # static unroll (S is small)
            h_chunk = []
            for j in range(TC):
                t = q * TC + j
                hcat = jnp.concatenate([h, h, h, h], axis=-1)      # (B, 4H)
                if masked:
                    hcat = hcat * zh                               # per-gate zh mask
                pre = xproj[t * B:(t + 1) * B, :] + jnp.dot(
                    hcat.astype(jnp.bfloat16), ublk,
                    preferred_element_type=jnp.float32)            # (B, 4H)

                # Lane-dense nonlinearities: one full-vreg sigmoid, slice gates.
                sig = jax.nn.sigmoid(pre)                          # (B, 4H)
                i_g = sig[:, 0 * H:1 * H]
                f_g = sig[:, 1 * H:2 * H]
                o_g = sig[:, 2 * H:3 * H]
                g_g = jnp.tanh(pre[:, 3 * H:4 * H])

                c = f_g * c + i_g * g_g
                h = o_g * jnp.tanh(c)
                h_chunk.append(h)

            # One unmasked (B, TC*H) = (8, 128) store per TC steps.
            hn_ref[q * B:(q + 1) * B, :] = (
                jnp.concatenate(h_chunk, axis=-1).astype(out_dtype))

        # Final states written exactly once.
        hT_ref[...] = h.astype(out_dtype)
        cT_ref[...] = c.astype(out_dtype)

    return kernel


# -----------------------------------------------------------------------------
# Plain-JAX glue: concrete-dropout masks, parameter init, wrapper
# -----------------------------------------------------------------------------
def sample_masks(key, p_logit, batch_size, input_size, hidden_size,
                 *, concrete=True, stop_dropout=False):
    """Mirror of StochasticLSTMCell._sample_mask (concrete dropout)."""
    if stop_dropout:
        zx = jnp.ones((4, batch_size, input_size), jnp.float32)
        # TODO(synk): PyTorch builds zh with input_size here (looks like a bug);
        # all-ones masks are an identity, so we use hidden_size so shapes match.
        zh = jnp.ones((4, batch_size, hidden_size), jnp.float32)
        return zx, zh

    p = jax.nn.sigmoid(p_logit)[0] if concrete else p_logit[0]
    kx, kh = jax.random.split(key)
    ux = jax.random.uniform(kx, (4, batch_size, input_size), jnp.float32)
    uh = jax.random.uniform(kh, (4, batch_size, hidden_size), jnp.float32)
    if input_size == 1:
        zx = 1.0 - jax.nn.sigmoid(
            (jnp.log(EPS) - jnp.log(1.0 + EPS)
             + jnp.log(ux + EPS) - jnp.log(1.0 - ux + EPS)) / TEMP)
    else:
        zx = (1.0 - jax.nn.sigmoid(
            (jnp.log(p + EPS) - jnp.log(1.0 - p + EPS)
             + jnp.log(ux + EPS) - jnp.log(1.0 - ux + EPS)) / TEMP)) / (1.0 - p)
    zh = (1.0 - jax.nn.sigmoid(
        (jnp.log(p + EPS) - jnp.log(1.0 - p + EPS)
         + jnp.log(uh + EPS) - jnp.log(1.0 - uh + EPS)) / TEMP)) / (1.0 - p)
    return zx, zh


def init_cell_params(key, input_size, hidden_size):
    """uniform(-k, k) init with k = 1/sqrt(hidden), like the PyTorch module."""
    k = 1.0 / jnp.sqrt(jnp.float32(hidden_size))
    keys = jax.random.split(key, 17)

    def u(kk, shape):
        return jax.random.uniform(kk, shape, jnp.float32, -k, k)

    # gate order (i, f, o, g); W[g] / U[g] stored as (in, out) = Linear.weight.T
    W = jnp.stack([u(keys[g], (input_size, hidden_size)) for g in range(4)])
    U = jnp.stack([u(keys[4 + g], (hidden_size, hidden_size)) for g in range(4)])
    bW = jnp.stack([u(keys[8 + g], (hidden_size,)) for g in range(4)])
    bU = jnp.stack([u(keys[12 + g], (hidden_size,)) for g in range(4)])
    p_logit = jax.random.normal(keys[16], (1,), jnp.float32)
    return dict(W=W, U=U, bW=bW, bU=bU, p_logit=p_logit)


@functools.partial(jax.jit, static_argnames=("stop_dropout", "concrete"))
def stochastic_lstm_cell_forward(params, x, key, *, stop_dropout=False,
                                 concrete=True):
    """Forward of StochasticLSTMCell.

    x: (S, B, I). Returns (hn (S,B,H), (h_T (B,H), c_T (B,H))).
    h0/c0 are zeros, matching the PyTorch module (no external initial state).
    """
    S, B, I = x.shape
    H = params["U"].shape[-1]
    dtype = x.dtype
    masked = not stop_dropout
    TC = _pick_time_chunk(S)

    # Pack the 4 gates into block-diagonal weights -> single fused matmuls.
    # Cast to bf16 once here; accumulation in-kernel stays f32.
    W_blk = _block_diag4(params["W"]).astype(jnp.bfloat16)          # (4I, 4H)
    U_blk = _block_diag4(params["U"]).astype(jnp.bfloat16)          # (4H, 4H)
    b_cat = (params["bW"] + params["bU"]).reshape(1, 4 * H).astype(jnp.float32)

    x2 = x.reshape(S * B, I).astype(jnp.float32)                    # (S*B, I)

    args = [x2]
    if masked:
        zx, zh = sample_masks(key, params["p_logit"], B, I, H,
                              concrete=concrete, stop_dropout=False)
        zx_cat = jnp.moveaxis(zx, 0, 1).reshape(B, 4 * I)           # (B, 4I)
        zh_cat = jnp.moveaxis(zh, 0, 1).reshape(B, 4 * H)           # (B, 4H)
        args += [zx_cat, zh_cat]
    args += [W_blk, U_blk, b_cat]

    # Advisory cost estimate (kernel is launch/overhead-bound at this size).
    flops = 2 * S * B * 4 * I * H + 2 * S * B * 4 * H * H + 10 * S * B * H
    transcendentals = 6 * S * B * H
    bytes_in = sum(int(np.prod(a.shape)) * a.dtype.itemsize for a in args)
    bytes_out = (S * B * H + 2 * B * H) * jnp.dtype(dtype).itemsize

    vmem_spec = pl.BlockSpec(memory_space=pltpu.MemorySpace.VMEM)

    kernel = _make_lstm_kernel(S, B, I, H, TC, masked, dtype)
    hn2, hT, cT = pl.pallas_call(
        kernel,
        out_shape=(jax.ShapeDtypeStruct((S // TC * B, TC * H), dtype),
                   jax.ShapeDtypeStruct((B, H), dtype),
                   jax.ShapeDtypeStruct((B, H), dtype)),
        in_specs=[vmem_spec] * len(args),
        out_specs=(vmem_spec, vmem_spec, vmem_spec),
        cost_estimate=pl.CostEstimate(flops=int(flops),
                                      transcendentals=int(transcendentals),
                                      bytes_accessed=int(bytes_in + bytes_out)),
    )(*args)

    # Un-pack the (S//TC * B, TC*H) lane-dense hn slab back to (S, B, H).
    hn = hn2.reshape(S // TC, B, TC, H).transpose(0, 2, 1, 3).reshape(S, B, H)
    return hn, (hT, cT)


# -----------------------------------------------------------------------------
# Plain-JAX reference (mirrors the PyTorch per-gate loop) for verification
# -----------------------------------------------------------------------------
def reference_forward(params, x, zx, zh):
    S, B, _ = x.shape
    H = params["U"].shape[-1]
    W, U = params["W"], params["U"]
    b = params["bW"] + params["bU"]
    h = jnp.zeros((B, H), jnp.float32)
    c = jnp.zeros((B, H), jnp.float32)
    hs = []
    for t in range(S):
        pre = [(x[t] * zx[g]) @ W[g] + (h * zh[g]) @ U[g] + b[g]
               for g in range(4)]
        i = jax.nn.sigmoid(pre[0])
        f = jax.nn.sigmoid(pre[1])
        o = jax.nn.sigmoid(pre[2])
        g_ = jnp.tanh(pre[3])
        c = f * c + i * g_
        h = o * jnp.tanh(c)
        hs.append(h)
    return jnp.stack(hs), (h, c)


# -----------------------------------------------------------------------------
if __name__ == "__main__":
    SEQ, BATCH, INPUT, HIDDEN = 8, 8, 8, 32   # 4*HIDDEN = 128 -> lane-dense gates

    root = jax.random.PRNGKey(0)
    k_param, k_mask, k_x = jax.random.split(root, 3)

    params = init_cell_params(k_param, INPUT, HIDDEN)
    x = jax.random.normal(k_x, (SEQ, BATCH, INPUT), jnp.float32)

    # Stochastic path (concrete-dropout masks active).
    hn, (hT, cT) = stochastic_lstm_cell_forward(params, x, k_mask,
                                                stop_dropout=False)
    # Deterministic path (stop_dropout=True -> specialized mask-free kernel).
    hn_d, (hT_d, cT_d) = stochastic_lstm_cell_forward(params, x, k_mask,
                                                      stop_dropout=True)
    jax.block_until_ready((hn, hT, cT, hn_d, hT_d, cT_d))

    assert hn.shape == (SEQ, BATCH, HIDDEN)
    assert hT.shape == (BATCH, HIDDEN) and cT.shape == (BATCH, HIDDEN)

    # --- verify against the plain-JAX per-gate reference ---------------------
    # Tolerance reflects bf16 MXU operands in the kernel vs default-precision
    # f32 matmuls in the reference (values are O(0.1-0.5); still a tight check).
    RTOL, ATOL = 1e-2, 2e-3
    zx, zh = sample_masks(k_mask, params["p_logit"], BATCH, INPUT, HIDDEN,
                          concrete=True, stop_dropout=False)
    hn_r, (hT_r, cT_r) = reference_forward(params, x, zx, zh)
    np.testing.assert_allclose(np.asarray(hn), np.asarray(hn_r),
                               rtol=RTOL, atol=ATOL)
    np.testing.assert_allclose(np.asarray(hT), np.asarray(hT_r),
                               rtol=RTOL, atol=ATOL)
    np.testing.assert_allclose(np.asarray(cT), np.asarray(cT_r),
                               rtol=RTOL, atol=ATOL)

    ones_x = jnp.ones((4, BATCH, INPUT), jnp.float32)
    ones_h = jnp.ones((4, BATCH, HIDDEN), jnp.float32)
    hn_dr, (hT_dr, cT_dr) = reference_forward(params, x, ones_x, ones_h)
    np.testing.assert_allclose(np.asarray(hn_d), np.asarray(hn_dr),
                               rtol=RTOL, atol=ATOL)
    np.testing.assert_allclose(np.asarray(hT_d), np.asarray(hT_dr),
                               rtol=RTOL, atol=ATOL)
    np.testing.assert_allclose(np.asarray(cT_d), np.asarray(cT_dr),
                               rtol=RTOL, atol=ATOL)

    print("KERNEL_OK")
</pallas_src>

<mosaic_0001>
module attributes {stable_mosaic.version = 11 : i64} {
  func.func @kernel(%arg0: memref<64x8xf32, #tpu.memory_space<vmem>>, %arg1: memref<8x32xf32, #tpu.memory_space<vmem>>, %arg2: memref<8x128xf32, #tpu.memory_space<vmem>>, %arg3: memref<32x128xbf16, #tpu.memory_space<vmem>>, %arg4: memref<128x128xbf16, #tpu.memory_space<vmem>>, %arg5: memref<1x128xf32, #tpu.memory_space<vmem>>, %arg6: memref<16x128xf32, #tpu.memory_space<vmem>>, %arg7: memref<8x32xf32, #tpu.memory_space<vmem>>, %arg8: memref<8x32xf32, #tpu.memory_space<vmem>>) attributes {dimension_semantics = [], scalar_prefetch = 0 : i64, scratch_operands = 0 : i64, tpu.core_type = #tpu.core_type<tc>} {
    %c0 = arith.constant 0 : index
    %c0_0 = arith.constant 0 : index
    %0 = vector.load %arg0[%c0, %c0_0] : memref<64x8xf32, #tpu.memory_space<vmem>>, vector<64x8xf32>
    %1 = tpu.concatenate %0, %0, %0, %0 in 1 : vector<64x8xf32>, vector<64x8xf32>, vector<64x8xf32>, vector<64x8xf32> -> vector<64x32xf32>
    %c0_1 = arith.constant 0 : index
    %c0_2 = arith.constant 0 : index
    %2 = vector.load %arg1[%c0_1, %c0_2] : memref<8x32xf32, #tpu.memory_space<vmem>>, vector<8x32xf32>
    %3 = tpu.concatenate %2, %2, %2, %2, %2, %2, %2, %2 in 0 : vector<8x32xf32>, vector<8x32xf32>, vector<8x32xf32>, vector<8x32xf32>, vector<8x32xf32>, vector<8x32xf32>, vector<8x32xf32>, vector<8x32xf32> -> vector<64x32xf32>
    %4 = arith.mulf %1, %3 : vector<64x32xf32>
    %5 = arith.truncf %4 : vector<64x32xf32> to vector<64x32xbf16>
    %c0_3 = arith.constant 0 : index
    %c0_4 = arith.constant 0 : index
    %6 = vector.load %arg3[%c0_3, %c0_4] : memref<32x128xbf16, #tpu.memory_space<vmem>>, vector<32x128xbf16>
    %cst = arith.constant dense<0.000000e+00> : vector<64x128xf32>
    %7 = tpu.matmul %5, %6, %cst {dimension_numbers = #tpu.dot_dimension_numbers<[1], [0], [0], [1], [0, 0, 1, 1], [], []>} : vector<64x32xbf16>, vector<32x128xbf16>, vector<64x128xf32> -> vector<64x128xf32>
    %c0_5 = arith.constant 0 : index
    %c0_6 = arith.constant 0 : index
    %8 = vector.load %arg5[%c0_5, %c0_6] : memref<1x128xf32, #tpu.memory_space<vmem>>, vector<1x128xf32>
    %9 = vector.broadcast %8 : vector<1x128xf32> to vector<64x128xf32>
    %10 = arith.addf %7, %9 : vector<64x128xf32>
    %c0_7 = arith.constant 0 : index
    %c0_8 = arith.constant 0 : index
    %11 = vector.load %arg4[%c0_7, %c0_8] : memref<128x128xbf16, #tpu.memory_space<vmem>>, vector<128x128xbf16>
    %c0_9 = arith.constant 0 : index
    %c0_10 = arith.constant 0 : index
    %12 = vector.load %arg2[%c0_9, %c0_10] : memref<8x128xf32, #tpu.memory_space<vmem>>, vector<8x128xf32>
    %cst_11 = arith.constant 0.000000e+00 : f32
    %13 = vector.broadcast %cst_11 : f32 to vector<8x32xf32>
    %cst_12 = arith.constant 0.000000e+00 : f32
    %14 = vector.broadcast %cst_12 : f32 to vector<8x32xf32>
    %15 = tpu.concatenate %13, %13, %13, %13 in 1 : vector<8x32xf32>, vector<8x32xf32>, vector<8x32xf32>, vector<8x32xf32> -> vector<8x128xf32>
    %16 = arith.mulf %15, %12 : vector<8x128xf32>
    %17 = vector.extract_strided_slice %10 {offsets = [0, 0], sizes = [8, 128], strides = [1, 1]} : vector<64x128xf32> to vector<8x128xf32>
    %18 = arith.truncf %16 : vector<8x128xf32> to vector<8x128xbf16>
    %cst_13 = arith.constant dense<0.000000e+00> : vector<8x128xf32>
    %19 = tpu.matmul %18, %11, %cst_13 {dimension_numbers = #tpu.dot_dimension_numbers<[1], [0], [0], [1], [0, 0, 1, 1], [], []>} : vector<8x128xbf16>, vector<128x128xbf16>, vector<8x128xf32> -> vector<8x128xf32>
    %20 = arith.addf %17, %19 : vector<8x128xf32>
    %21 = arith.negf %20 : vector<8x128xf32>
    %22 = math.exp %21 : vector<8x128xf32>
    %cst_14 = arith.constant 1.000000e+00 : f32
    %23 = vector.broadcast %cst_14 : f32 to vector<8x128xf32>
    %24 = arith.addf %23, %22 : vector<8x128xf32>
    %25 = arith.divf %23, %24 : vector<8x128xf32>
    %26 = vector.extract_strided_slice %25 {offsets = [0, 0], sizes = [8, 32], strides = [1, 1]} : vector<8x128xf32> to vector<8x32xf32>
    %27 = vector.extract_strided_slice %25 {offsets = [0, 32], sizes = [8, 32], strides = [1, 1]} : vector<8x128xf32> to vector<8x32xf32>
    %28 = vector.extract_strided_slice %25 {offsets = [0, 64], sizes = [8, 32], strides = [1, 1]} : vector<8x128xf32> to vector<8x32xf32>
    %29 = vector.extract_strided_slice %20 {offsets = [0, 96], sizes = [8, 32], strides = [1, 1]} : vector<8x128xf32> to vector<8x32xf32>
    %30 = math.tanh %29 : vector<8x32xf32>
    %31 = arith.mulf %27, %14 : vector<8x32xf32>
    %32 = arith.mulf %26, %30 : vector<8x32xf32>
    %33 = arith.addf %31, %32 : vector<8x32xf32>
    %34 = math.tanh %33 : vector<8x32xf32>
    %35 = arith.mulf %28, %34 : vector<8x32xf32>
    %36 = tpu.concatenate %35, %35, %35, %35 in 1 : vector<8x32xf32>, vector<8x32xf32>, vector<8x32xf32>, vector<8x32xf32> -> vector<8x128xf32>
    %37 = arith.mulf %36, %12 : vector<8x128xf32>
    %38 = vector.extract_strided_slice %10 {offsets = [8, 0], sizes = [8, 128], strides = [1, 1]} : vector<64x128xf32> to vector<8x128xf32>
    %39 = arith.truncf %37 : vector<8x128xf32> to vector<8x128xbf16>
    %cst_15 = arith.constant dense<0.000000e+00> : vector<8x128xf32>
    %40 = tpu.matmul %39, %11, %cst_15 {dimension_numbers = #tpu.dot_dimension_numbers<[1], [0], [0], [1], [0, 0, 1, 1], [], []>} : vector<8x128xbf16>, vector<128x128xbf16>, vector<8x128xf32> -> vector<8x128xf32>
    %41 = arith.addf %38, %40 : vector<8x128xf32>
    %42 = arith.negf %41 : vector<8x128xf32>
    %43 = math.exp %42 : vector<8x128xf32>
    %cst_16 = arith.constant 1.000000e+00 : f32
    %44 = vector.broadcast %cst_16 : f32 to vector<8x128xf32>
    %45 = arith.addf %44, %43 : vector<8x128xf32>
    %46 = arith.divf %44, %45 : vector<8x128xf32>
    %47 = vector.extract_strided_slice %46 {offsets = [0, 0], sizes = [8, 32], strides = [1, 1]} : vector<8x128xf32> to vector<8x32xf32>
    %48 = vector.extract_strided_slice %46 {offsets = [0, 32], sizes = [8, 32], strides = [1, 1]} : vector<8x128xf32> to vector<8x32xf32>
    %49 = vector.extract_strided_slice %46 {offsets = [0, 64], sizes = [8, 32], strides = [1, 1]} : vector<8x128xf32> to vector<8x32xf32>
    %50 = vector.extract_strided_slice %41 {offsets = [0, 96], sizes = [8, 32], strides = [1, 1]} : vector<8x128xf32> to vector<8x32xf32>
    %51 = math.tanh %50 : vector<8x32xf32>
    %52 = arith.mulf %48, %33 : vector<8x32xf32>
    %53 = arith.mulf %47, %51 : vector<8x32xf32>
    %54 = arith.addf %52, %53 : vector<8x32xf32>
    %55 = math.tanh %54 : vector<8x32xf32>
    %56 = arith.mulf %49, %55 : vector<8x32xf32>
    %57 = tpu.concatenate %56, %56, %56, %56 in 1 : vector<8x32xf32>, vector<8x32xf32>, vector<8x32xf32>, vector<8x32xf32> -> vector<8x128xf32>
    %58 = arith.mulf %57, %12 : vector<8x128xf32>
    %59 = vector.extract_strided_slice %10 {offsets = [16, 0], sizes = [8, 128], strides = [1, 1]} : vector<64x128xf32> to vector<8x128xf32>
    %60 = arith.truncf %58 : vector<8x128xf32> to vector<8x128xbf16>
    %cst_17 = arith.constant dense<0.000000e+00> : vector<8x128xf32>
    %61 = tpu.matmul %60, %11, %cst_17 {dimension_numbers = #tpu.dot_dimension_numbers<[1], [0], [0], [1], [0, 0, 1, 1], [], []>} : vector<8x128xbf16>, vector<128x128xbf16>, vector<8x128xf32> -> vector<8x128xf32>
    %62 = arith.addf %59, %61 : vector<8x128xf32>
    %63 = arith.negf %62 : vector<8x128xf32>
    %64 = math.exp %63 : vector<8x128xf32>
    %cst_18 = arith.constant 1.000000e+00 : f32
    %65 = vector.broadcast %cst_18 : f32 to vector<8x128xf32>
    %66 = arith.addf %65, %64 : vector<8x128xf32>
    %67 = arith.divf %65, %66 : vector<8x128xf32>
    %68 = vector.extract_strided_slice %67 {offsets = [0, 0], sizes = [8, 32], strides = [1, 1]} : vector<8x128xf32> to vector<8x32xf32>
    %69 = vector.extract_strided_slice %67 {offsets = [0, 32], sizes = [8, 32], strides = [1, 1]} : vector<8x128xf32> to vector<8x32xf32>
    %70 = vector.extract_strided_slice %67 {offsets = [0, 64], sizes = [8, 32], strides = [1, 1]} : vector<8x128xf32> to vector<8x32xf32>
    %71 = vector.extract_strided_slice %62 {offsets = [0, 96], sizes = [8, 32], strides = [1, 1]} : vector<8x128xf32> to vector<8x32xf32>
    %72 = math.tanh %71 : vector<8x32xf32>
    %73 = arith.mulf %69, %54 : vector<8x32xf32>
    %74 = arith.mulf %68, %72 : vector<8x32xf32>
    %75 = arith.addf %73, %74 : vector<8x32xf32>
    %76 = math.tanh %75 : vector<8x32xf32>
    %77 = arith.mulf %70, %76 : vector<8x32xf32>
    %78 = tpu.concatenate %77, %77, %77, %77 in 1 : vector<8x32xf32>, vector<8x32xf32>, vector<8x32xf32>, vector<8x32xf32> -> vector<8x128xf32>
    %79 = arith.mulf %78, %12 : vector<8x128xf32>
    %80 = vector.extract_strided_slice %10 {offsets = [24, 0], sizes = [8, 128], strides = [1, 1]} : vector<64x128xf32> to vector<8x128xf32>
    %81 = arith.truncf %79 : vector<8x128xf32> to vector<8x128xbf16>
    %cst_19 = arith.constant dense<0.000000e+00> : vector<8x128xf32>
    %82 = tpu.matmul %81, %11, %cst_19 {dimension_numbers = #tpu.dot_dimension_numbers<[1], [0], [0], [1], [0, 0, 1, 1], [], []>} : vector<8x128xbf16>, vector<128x128xbf16>, vector<8x128xf32> -> vector<8x128xf32>
    %83 = arith.addf %80, %82 : vector<8x128xf32>
    %84 = arith.negf %83 : vector<8x128xf32>
    %85 = math.exp %84 : vector<8x128xf32>
    %cst_20 = arith.constant 1.000000e+00 : f32
    %86 = vector.broadcast %cst_20 : f32 to vector<8x128xf32>
    %87 = arith.addf %86, %85 : vector<8x128xf32>
    %88 = arith.divf %86, %87 : vector<8x128xf32>
    %89 = vector.extract_strided_slice %88 {offsets = [0, 0], sizes = [8, 32], strides = [1, 1]} : vector<8x128xf32> to vector<8x32xf32>
    %90 = vector.extract_strided_slice %88 {offsets = [0, 32], sizes = [8, 32], strides = [1, 1]} : vector<8x128xf32> to vector<8x32xf32>
    %91 = vector.extract_strided_slice %88 {offsets = [0, 64], sizes = [8, 32], strides = [1, 1]} : vector<8x128xf32> to vector<8x32xf32>
    %92 = vector.extract_strided_slice %83 {offsets = [0, 96], sizes = [8, 32], strides = [1, 1]} : vector<8x128xf32> to vector<8x32xf32>
    %93 = math.tanh %92 : vector<8x32xf32>
    %94 = arith.mulf %90, %75 : vector<8x32xf32>
    %95 = arith.mulf %89, %93 : vector<8x32xf32>
    %96 = arith.addf %94, %95 : vector<8x32xf32>
    %97 = math.tanh %96 : vector<8x32xf32>
    %98 = arith.mulf %91, %97 : vector<8x32xf32>
    %99 = tpu.concatenate %35, %56, %77, %98 in 1 : vector<8x32xf32>, vector<8x32xf32>, vector<8x32xf32>, vector<8x32xf32> -> vector<8x128xf32>
    %c0_21 = arith.constant 0 : index
    %c0_22 = arith.constant 0 : index
    %100 = vector.load %arg6[%c0_21, %c0_22] : memref<16x128xf32, #tpu.memory_space<vmem>>, vector<8x128xf32>
    tpu.vector_store %arg6[%c0_21, %c0_22], %99 {strides = array<i32>} : memref<16x128xf32, #tpu.memory_space<vmem>>, vector<8x128xf32>,
    %101 = tpu.concatenate %98, %98, %98, %98 in 1 : vector<8x32xf32>, vector<8x32xf32>, vector<8x32xf32>, vector<8x32xf32> -> vector<8x128xf32>
    %102 = arith.mulf %101, %12 : vector<8x128xf32>
    %103 = vector.extract_strided_slice %10 {offsets = [32, 0], sizes = [8, 128], strides = [1, 1]} : vector<64x128xf32> to vector<8x128xf32>
    %104 = arith.truncf %102 : vector<8x128xf32> to vector<8x128xbf16>
    %cst_23 = arith.constant dense<0.000000e+00> : vector<8x128xf32>
    %105 = tpu.matmul %104, %11, %cst_23 {dimension_numbers = #tpu.dot_dimension_numbers<[1], [0], [0], [1], [0, 0, 1, 1], [], []>} : vector<8x128xbf16>, vector<128x128xbf16>, vector<8x128xf32> -> vector<8x128xf32>
    %106 = arith.addf %103, %105 : vector<8x128xf32>
    %107 = arith.negf %106 : vector<8x128xf32>
    %108 = math.exp %107 : vector<8x128xf32>
    %cst_24 = arith.constant 1.000000e+00 : f32
    %109 = vector.broadcast %cst_24 : f32 to vector<8x128xf32>
    %110 = arith.addf %109, %108 : vector<8x128xf32>
    %111 = arith.divf %109, %110 : vector<8x128xf32>
    %112 = vector.extract_strided_slice %111 {offsets = [0, 0], sizes = [8, 32], strides = [1, 1]} : vector<8x128xf32> to vector<8x32xf32>
    %113 = vector.extract_strided_slice %111 {offsets = [0, 32], sizes = [8, 32], strides = [1, 1]} : vector<8x128xf32> to vector<8x32xf32>
    %114 = vector.extract_strided_slice %111 {offsets = [0, 64], sizes = [8, 32], strides = [1, 1]} : vector<8x128xf32> to vector<8x32xf32>
    %115 = vector.extract_strided_slice %106 {offsets = [0, 96], sizes = [8, 32], strides = [1, 1]} : vector<8x128xf32> to vector<8x32xf32>
    %116 = math.tanh %115 : vector<8x32xf32>
    %117 = arith.mulf %113, %96 : vector<8x32xf32>
    %118 = arith.mulf %112, %116 : vector<8x32xf32>
    %119 = arith.addf %117, %118 : vector<8x32xf32>
    %120 = math.tanh %119 : vector<8x32xf32>
    %121 = arith.mulf %114, %120 : vector<8x32xf32>
    %122 = tpu.concatenate %121, %121, %121, %121 in 1 : vector<8x32xf32>, vector<8x32xf32>, vector<8x32xf32>, vector<8x32xf32> -> vector<8x128xf32>
    %123 = arith.mulf %122, %12 : vector<8x128xf32>
    %124 = vector.extract_strided_slice %10 {offsets = [40, 0], sizes = [8, 128], strides = [1, 1]} : vector<64x128xf32> to vector<8x128xf32>
    %125 = arith.truncf %123 : vector<8x128xf32> to vector<8x128xbf16>
    %cst_25 = arith.constant dense<0.000000e+00> : vector<8x128xf32>
    %126 = tpu.matmul %125, %11, %cst_25 {dimension_numbers = #tpu.dot_dimension_numbers<[1], [0], [0], [1], [0, 0, 1, 1], [], []>} : vector<8x128xbf16>, vector<128x128xbf16>, vector<8x128xf32> -> vector<8x128xf32>
    %127 = arith.addf %124, %126 : vector<8x128xf32>
    %128 = arith.negf %127 : vector<8x128xf32>
    %129 = math.exp %128 : vector<8x128xf32>
    %cst_26 = arith.constant 1.000000e+00 : f32
    %130 = vector.broadcast %cst_26 : f32 to vector<8x128xf32>
    %131 = arith.addf %130, %129 : vector<8x128xf32>
    %132 = arith.divf %130, %131 : vector<8x128xf32>
    %133 = vector.extract_strided_slice %132 {offsets = [0, 0], sizes = [8, 32], strides = [1, 1]} : vector<8x128xf32> to vector<8x32xf32>
    %134 = vector.extract_strided_slice %132 {offsets = [0, 32], sizes = [8, 32], strides = [1, 1]} : vector<8x128xf32> to vector<8x32xf32>
    %135 = vector.extract_strided_slice %132 {offsets = [0, 64], sizes = [8, 32], strides = [1, 1]} : vector<8x128xf32> to vector<8x32xf32>
    %136 = vector.extract_strided_slice %127 {offsets = [0, 96], sizes = [8, 32], strides = [1, 1]} : vector<8x128xf32> to vector<8x32xf32>
    %137 = math.tanh %136 : vector<8x32xf32>
    %138 = arith.mulf %134, %119 : vector<8x32xf32>
    %139 = arith.mulf %133, %137 : vector<8x32xf32>
    %140 = arith.addf %138, %139 : vector<8x32xf32>
    %141 = math.tanh %140 : vector<8x32xf32>
    %142 = arith.mulf %135, %141 : vector<8x32xf32>
    %143 = tpu.concatenate %142, %142, %142, %142 in 1 : vector<8x32xf32>, vector<8x32xf32>, vector<8x32xf32>, vector<8x32xf32> -> vector<8x128xf32>
    %144 = arith.mulf %143, %12 : vector<8x128xf32>
    %145 = vector.extract_strided_slice %10 {offsets = [48, 0], sizes = [8, 128], strides = [1, 1]} : vector<64x128xf32> to vector<8x128xf32>
    %146 = arith.truncf %144 : vector<8x128xf32> to vector<8x128xbf16>
    %cst_27 = arith.constant dense<0.000000e+00> : vector<8x128xf32>
    %147 = tpu.matmul %146, %11, %cst_27 {dimension_numbers = #tpu.dot_dimension_numbers<[1], [0], [0], [1], [0, 0, 1, 1], [], []>} : vector<8x128xbf16>, vector<128x128xbf16>, vector<8x128xf32> -> vector<8x128xf32>
    %148 = arith.addf %145, %147 : vector<8x128xf32>
    %149 = arith.negf %148 : vector<8x128xf32>
    %150 = math.exp %149 : vector<8x128xf32>
    %cst_28 = arith.constant 1.000000e+00 : f32
    %151 = vector.broadcast %cst_28 : f32 to vector<8x128xf32>
    %152 = arith.addf %151, %150 : vector<8x128xf32>
    %153 = arith.divf %151, %152 : vector<8x128xf32>
    %154 = vector.extract_strided_slice %153 {offsets = [0, 0], sizes = [8, 32], strides = [1, 1]} : vector<8x128xf32> to vector<8x32xf32>
    %155 = vector.extract_strided_slice %153 {offsets = [0, 32], sizes = [8, 32], strides = [1, 1]} : vector<8x128xf32> to vector<8x32xf32>
    %156 = vector.extract_strided_slice %153 {offsets = [0, 64], sizes = [8, 32], strides = [1, 1]} : vector<8x128xf32> to vector<8x32xf32>
    %157 = vector.extract_strided_slice %148 {offsets = [0, 96], sizes = [8, 32], strides = [1, 1]} : vector<8x128xf32> to vector<8x32xf32>
    %158 = math.tanh %157 : vector<8x32xf32>
    %159 = arith.mulf %155, %140 : vector<8x32xf32>
    %160 = arith.mulf %154, %158 : vector<8x32xf32>
    %161 = arith.addf %159, %160 : vector<8x32xf32>
    %162 = math.tanh %161 : vector<8x32xf32>
    %163 = arith.mulf %156, %162 : vector<8x32xf32>
    %164 = tpu.concatenate %163, %163, %163, %163 in 1 : vector<8x32xf32>, vector<8x32xf32>, vector<8x32xf32>, vector<8x32xf32> -> vector<8x128xf32>
    %165 = arith.mulf %164, %12 : vector<8x128xf32>
    %166 = vector.extract_strided_slice %10 {offsets = [56, 0], sizes = [8, 128], strides = [1, 1]} : vector<64x128xf32> to vector<8x128xf32>
    %167 = arith.truncf %165 : vector<8x128xf32> to vector<8x128xbf16>
    %cst_29 = arith.constant dense<0.000000e+00> : vector<8x128xf32>
    %168 = tpu.matmul %167, %11, %cst_29 {dimension_numbers = #tpu.dot_dimension_numbers<[1], [0], [0], [1], [0, 0, 1, 1], [], []>} : vector<8x128xbf16>, vector<128x128xbf16>, vector<8x128xf32> -> vector<8x128xf32>
    %169 = arith.addf %166, %168 : vector<8x128xf32>
    %170 = arith.negf %169 : vector<8x128xf32>
    %171 = math.exp %170 : vector<8x128xf32>
    %cst_30 = arith.constant 1.000000e+00 : f32
    %172 = vector.broadcast %cst_30 : f32 to vector<8x128xf32>
    %173 = arith.addf %172, %171 : vector<8x128xf32>
    %174 = arith.divf %172, %173 : vector<8x128xf32>
    %175 = vector.extract_strided_slice %174 {offsets = [0, 0], sizes = [8, 32], strides = [1, 1]} : vector<8x128xf32> to vector<8x32xf32>
    %176 = vector.extract_strided_slice %174 {offsets = [0, 32], sizes = [8, 32], strides = [1, 1]} : vector<8x128xf32> to vector<8x32xf32>
    %177 = vector.extract_strided_slice %174 {offsets = [0, 64], sizes = [8, 32], strides = [1, 1]} : vector<8x128xf32> to vector<8x32xf32>
    %178 = vector.extract_strided_slice %169 {offsets = [0, 96], sizes = [8, 32], strides = [1, 1]} : vector<8x128xf32> to vector<8x32xf32>
    %179 = math.tanh %178 : vector<8x32xf32>
    %180 = arith.mulf %176, %161 : vector<8x32xf32>
    %181 = arith.mulf %175, %179 : vector<8x32xf32>
    %182 = arith.addf %180, %181 : vector<8x32xf32>
    %183 = math.tanh %182 : vector<8x32xf32>
    %184 = arith.mulf %177, %183 : vector<8x32xf32>
    %185 = tpu.concatenate %121, %142, %163, %184 in 1 : vector<8x32xf32>, vector<8x32xf32>, vector<8x32xf32>, vector<8x32xf32> -> vector<8x128xf32>
    %c8 = arith.constant 8 : index
    %c0_31 = arith.constant 0 : index
    %186 = vector.load %arg6[%c8, %c0_31] : memref<16x128xf32, #tpu.memory_space<vmem>>, vector<8x128xf32>
    tpu.vector_store %arg6[%c8, %c0_31], %185 {strides = array<i32>} : memref<16x128xf32, #tpu.memory_space<vmem>>, vector<8x128xf32>,
    %c0_32 = arith.constant 0 : index
    %c0_33 = arith.constant 0 : index
    %187 = vector.load %arg7[%c0_32, %c0_33] : memref<8x32xf32, #tpu.memory_space<vmem>>, vector<8x32xf32>
    tpu.vector_store %arg7[%c0_32, %c0_33], %184 {strides = array<i32>} : memref<8x32xf32, #tpu.memory_space<vmem>>, vector<8x32xf32>,
    %c0_34 = arith.constant 0 : index
    %c0_35 = arith.constant 0 : index
    %188 = vector.load %arg8[%c0_34, %c0_35] : memref<8x32xf32, #tpu.memory_space<vmem>>, vector<8x32xf32>
    tpu.vector_store %arg8[%c0_34, %c0_35], %182 {strides = array<i32>} : memref<8x32xf32, #tpu.memory_space<vmem>>, vector<8x32xf32>,
    return
  }
}

</mosaic_0001>

<llo_original>
// kernel: stochastic_lstm_cell_forward.1
$region0: #{stochastic_lstm_cell_forward.1}
  #allocation0 [shape = 'u32[]', space=smem, size = 0x4, offset = 0x4, fixed_abs, tag = 'smem constant byte address 0x4 - core index']
  #allocation1 [shape = 'u32[144,128]{1,0:T(1,128)}', space=vmem, size = 0x12000, scoped, tag = 'internal scratch']
  %s0 = inlined_call_operand.vmem [shape: f32[64,8], index: 0, kind: input, shape index: {}]
  %s1 = inlined_call_operand.vmem [shape: f32[8,32], index: 1, kind: input, shape index: {}]
  %s2 = inlined_call_operand.vmem [shape: f32[8,128], index: 2, kind: input, shape index: {}]
  %s3 = inlined_call_operand.vmem [shape: bf16[32,128], index: 3, kind: input, shape index: {}]
  %s4 = inlined_call_operand.vmem [shape: bf16[128,128], index: 4, kind: input, shape index: {}]
  %s5 = inlined_call_operand.vmem [shape: f32[1,128], index: 5, kind: input, shape index: {}]
  %s6 = inlined_call_operand.vmem [shape: f32[16,128], index: 6, kind: output, shape index: {0}]
  %s7 = inlined_call_operand.hbm [shape: f32[8,32], index: 7, kind: output, shape index: {1}]
  %s8 = inlined_call_operand.hbm [shape: f32[8,32], index: 8, kind: output, shape index: {2}]
  %9 = xla_tuple %s6, %s7, %s8
  %s10 = sld [smem:[#allocation0]]
  $region50: #{stochastic_lstm_cell_forward.1} parent=0
    _
  %s12 = ssub.s32 1, %s10
  %s13 = scalar_select 0, %s12, %s10
  $region1: #{stochastic_lstm_cell_forward.1} parent=0
    #allocation2 [shape = 'u8[4096]{0}', space=vmem, size = 0x1000, scoped, tag = 'output window, operand 1, single buffered']
    #allocation3 [shape = 's32[1]{0}', space=sflag, size = 0x4, scoped, tag = 'scoped memory for stochastic_lstm_cell_forward.1']
    #allocation4 [shape = 'u8[4096]{0}', space=vmem, size = 0x1000, scoped, tag = 'output window, operand 2, single buffered']
    #allocation5 [shape = 's32[1]{0}', space=sflag, size = 0x4, scoped, tag = 'scoped memory for stochastic_lstm_cell_forward.1']
    %14 = vsyncpa [#allocation3], 0
    %15 = vsyncpa [#allocation5], 0
    // Predicated region
    $region2: #{stochastic_lstm_cell_forward.1} parent=1 // pred_check
      _
    $region3: #{stochastic_lstm_cell_forward.1} parent=1 // pred_check_branch
      %17 = sbr.rel (0) target = $region5
    $region4: #{stochastic_lstm_cell_forward.1} parent=1 // pred_region
      _
    $region5: #{stochastic_lstm_cell_forward.1} parent=1 // pred_fallthru
      _
    // Predicated region
    $region6: #{stochastic_lstm_cell_forward.1} parent=1 // pred_check
      _
    $region7: #{stochastic_lstm_cell_forward.1} parent=1 // pred_check_branch
      %19 = sbr.rel (0) target = $region9
    $region8: #{stochastic_lstm_cell_forward.1} parent=1 // pred_region
      _
    $region9: #{stochastic_lstm_cell_forward.1} parent=1 // pred_fallthru
      _
    // Predicated region
    $region10: #{stochastic_lstm_cell_forward.1} parent=1 // pred_check
      _
    $region11: #{stochastic_lstm_cell_forward.1} parent=1 // pred_check_branch
      %21 = sbr.rel (0) target = $region13
    $region12: #{stochastic_lstm_cell_forward.1} parent=1 // pred_region
      _
    $region13: #{stochastic_lstm_cell_forward.1} parent=1 // pred_fallthru
      _
    // Predicated region
    $region14: #{stochastic_lstm_cell_forward.1} parent=1 // pred_check
      _
    $region15: #{stochastic_lstm_cell_forward.1} parent=1 // pred_check_branch
      %23 = sbr.rel (0) target = $region17
    $region16: #{stochastic_lstm_cell_forward.1} parent=1 // pred_region
      _
    $region17: #{stochastic_lstm_cell_forward.1} parent=1 // pred_fallthru
      _
    // Predicated region
    $region18: #{stochastic_lstm_cell_forward.1} parent=1 // pred_check
      _
    $region19: #{stochastic_lstm_cell_forward.1} parent=1 // pred_check_branch
      %25 = sbr.rel (0) target = $region21
    $region20: #{stochastic_lstm_cell_forward.1} parent=1 // pred_region
      _
    $region21: #{stochastic_lstm_cell_forward.1} parent=1 // pred_fallthru
      _
    // Predicated region
    $region22: #{stochastic_lstm_cell_forward.1} parent=1 // pred_check
      _
    $region23: #{stochastic_lstm_cell_forward.1} parent=1 // pred_check_branch
      %27 = sbr.rel (0) target = $region25
    $region24: #{stochastic_lstm_cell_forward.1} parent=1 // pred_region
      _
    $region25: #{stochastic_lstm_cell_forward.1} parent=1 // pred_fallthru
      _
    %v29 = vld [vmem:[%s0] sm:$0xff]
    %v30 = vld [vmem:[%s0 + $0x8] sm:$0xff]
    %v31 = vld [vmem:[%s0 + $0x10] sm:$0xff]
    %v32 = vld [vmem:[%s0 + $0x18] sm:$0xff]
    %v33 = vld [vmem:[%s0 + $0x20] sm:$0xff]
    %v34 = vld [vmem:[%s0 + $0x28] sm:$0xff]
    %v35 = vld [vmem:[%s0 + $0x30] sm:$0xff]
    %v36 = vld [vmem:[%s0 + $0x38] sm:$0xff]
    %45 = vrot.lane.b32.xlu0 %v29, 8
    %v46 = vpop.permute.xlu0 %45
    %47 = vrot.lane.b32.xlu0 %v30, 8
    %v48 = vpop.permute.xlu0 %47
    %49 = vrot.lane.b32.xlu0 %v31, 8
    %v50 = vpop.permute.xlu0 %49
    %51 = vrot.lane.b32.xlu0 %v32, 8
    %v52 = vpop.permute.xlu0 %51
    %53 = vrot.lane.b32.xlu0 %v33, 8
    %v54 = vpop.permute.xlu0 %53
    %55 = vrot.lane.b32.xlu0 %v34, 8
    %v56 = vpop.permute.xlu0 %55
    %57 = vrot.lane.b32.xlu0 %v35, 8
    %v58 = vpop.permute.xlu0 %57
    %59 = vrot.lane.b32.xlu0 %v36, 8
    %v60 = vpop.permute.xlu0 %59
    %69 = vrot.lane.b32.xlu0 %v29, 16
    %v70 = vpop.permute.xlu0 %69
    %71 = vrot.lane.b32.xlu0 %v30, 16
    %v72 = vpop.permute.xlu0 %71
    %73 = vrot.lane.b32.xlu0 %v31, 16
    %v74 = vpop.permute.xlu0 %73
    %75 = vrot.lane.b32.xlu0 %v32, 16
    %v76 = vpop.permute.xlu0 %75
    %77 = vrot.lane.b32.xlu0 %v33, 16
    %v78 = vpop.permute.xlu0 %77
    %79 = vrot.lane.b32.xlu0 %v34, 16
    %v80 = vpop.permute.xlu0 %79
    %81 = vrot.lane.b32.xlu0 %v35, 16
    %v82 = vpop.permute.xlu0 %81
    %83 = vrot.lane.b32.xlu0 %v36, 16
    %v84 = vpop.permute.xlu0 %83
    %93 = vrot.lane.b32.xlu0 %v29, 24
    %v94 = vpop.permute.xlu0 %93
    %95 = vrot.lane.b32.xlu0 %v30, 24
    %v96 = vpop.permute.xlu0 %95
    %97 = vrot.lane.b32.xlu0 %v31, 24
    %v98 = vpop.permute.xlu0 %97
    %99 = vrot.lane.b32.xlu0 %v32, 24
    %v100 = vpop.permute.xlu0 %99
    %101 = vrot.lane.b32.xlu0 %v33, 24
    %v102 = vpop.permute.xlu0 %101
    %103 = vrot.lane.b32.xlu0 %v34, 24
    %v104 = vpop.permute.xlu0 %103
    %105 = vrot.lane.b32.xlu0 %v35, 24
    %v106 = vpop.permute.xlu0 %105
    %107 = vrot.lane.b32.xlu0 %v36, 24
    %v108 = vpop.permute.xlu0 %107
    %vm117 = vcmask 64512
    %v118 = vsel %vm117, %v29, %v46
    %v119 = vsel %vm117, %v30, %v48
    %v120 = vsel %vm117, %v31, %v50
    %v121 = vsel %vm117, %v32, %v52
    %v122 = vsel %vm117, %v33, %v54
    %v123 = vsel %vm117, %v34, %v56
    %v124 = vsel %vm117, %v35, %v58
    %v125 = vsel %vm117, %v36, %v60
    %vm126 = vcmask 130048
    %v127 = vsel %vm126, %v118, %v70
    %v128 = vsel %vm126, %v119, %v72
    %v129 = vsel %vm126, %v120, %v74
    %v130 = vsel %vm126, %v121, %v76
    %v131 = vsel %vm126, %v122, %v78
    %v132 = vsel %vm126, %v123, %v80
    %v133 = vsel %vm126, %v124, %v82
    %v134 = vsel %vm126, %v125, %v84
    %vm135 = vcmask 195584
    %v136 = vsel %vm135, %v127, %v94
    %v137 = vsel %vm135, %v128, %v96
    %v138 = vsel %vm135, %v129, %v98
    %v139 = vsel %vm135, %v130, %v100
    %v140 = vsel %vm135, %v131, %v102
    %v141 = vsel %vm135, %v132, %v104
    %v142 = vsel %vm135, %v133, %v106
    %v143 = vsel %vm135, %v134, %v108
    %v144 = vld [vmem:[%s1] sm:$0xff]
    %v145 = vmul.f32 %v136, %v144
    %v146 = vmul.f32 %v137, %v144
    %v147 = vmul.f32 %v138, %v144
    %v148 = vmul.f32 %v139, %v144
    %v149 = vmul.f32 %v140, %v144
    %v150 = vmul.f32 %v141, %v144
    %v151 = vmul.f32 %v142, %v144
    %v152 = vmul.f32 %v143, %v144
    %v153 = vpack.c.bf16 %v146, %v145
    %v154 = vpack.c.bf16 %v148, %v147
    %v155 = vpack.c.bf16 %v150, %v149
    %v156 = vpack.c.bf16 %v152, %v151
    %v157 = vld [vmem:[%s3] sm:$0xf]
    %v158 = vld [vmem:[%s3 + $0x4] sm:$0xf]
    %v159 = vld [vmem:[%s3 + $0x8] sm:$0xf]
    %v160 = vld [vmem:[%s3 + $0xc] sm:$0xf]
    %v161 = vld [vmem:[%s5] sm:$0x1]
    %v163 = vlaneseq
    %v164 = vshrl.u32 %v163, 7
    %v165 = vsub.s32 0, %v164
    %v166 = vrot.slane %v161, %v165
    %v172 = vunpack.c.l.b16 %v157
    %v173 = vunpack.c.l.b16 %v158
    %v174 = vunpack.c.l.b16 %v159
    %v175 = vunpack.c.l.b16 %v160
    %v176 = vpack.c.b16 %v173, %v172
    %v177 = vpack.c.b16 %v175, %v174
    %vm180 = vcmask 261120
    %v182 = vsel %vm180, %v153, 0
    %v185 = vsel %vm180, %v154, 0
    %v188 = vsel %vm180, %v155, 0
    %v191 = vsel %vm180, %v156, 0
    %193 = vmatprep.subr.bf16.mxu0 0
    %194 = vmatpush1.bf16.msra.mxu0 %v176
    %195 = vmatprep.subr.bf16.mxu0 0
    %196 = vmatpush1.bf16.msra.mxu0 %v177
    %197 = vmatprep.subr.bf16.mxu0 0
    %198 = vmatpush1.bf16.msra.mxu0 0
    %199 = vmatprep.subr.bf16.mxu0 0
    %200 = vmatpush1.bf16.msra.mxu0 0
    %201 = vmatprep.subr.bf16.mxu0 0
    %202 = vmatpush1.bf16.msra.mxu0 0
    %203 = vmatprep.subr.bf16.mxu0 0
    %204 = vmatpush1.bf16.msra.mxu0 0
    %205 = vmatprep.subr.bf16.mxu0 0
    %206 = vmatpush1.bf16.msra.mxu0 0
    %207 = vmatprep.subr.bf16.mxu0 0
    %208 = vmatpush1.bf16.msra.mxu0 0
    %209 = vmatprep.subr.bf16.mxu0 0
    %210 = vmatpush1.bf16.msra.mxu0 0
    %211 = vmatprep.subr.bf16.mxu0 0
    %212 = vmatpush1.bf16.msra.mxu0 0
    %213 = vmatprep.subr.bf16.mxu0 0
    %214 = vmatpush1.bf16.msra.mxu0 0
    %215 = vmatprep.subr.bf16.mxu0 0
    %216 = vmatpush1.bf16.msra.mxu0 0
    %217 = vmatprep.subr.bf16.mxu0 0
    %218 = vmatpush1.bf16.msra.mxu0 0
    %219 = vmatprep.subr.bf16.mxu0 0
    %220 = vmatpush1.bf16.msra.mxu0 0
    %221 = vmatprep.subr.bf16.mxu0 0
    %222 = vmatpush1.bf16.msra.mxu0 0
    %223 = vmatprep.subr.bf16.mxu0 0
    %224 = vmatpush1.bf16.msra.mxu0 0
    %225 = vmatprep.mubr.bf16.mxu0 0
    %226 = vmatmul.mubr.bf16.gmra.mrb[0].mxu0 %v182
    %v227 = vpop.f32.mrb[0].mxu0
    %v228 = vadd.f32 %v166, %v227
    %v229 = vpop.f32.mrb[0].mxu0
    %v230 = vpop.f32.mrb[0].mxu0
    %v231 = vadd.f32 %v166, %v230
    %v232 = vpop.f32.mrb[0].mxu0
    %233 = vmatprep.mubr.bf16.mxu0 0
    %234 = vmatmul.mubr.bf16.gmra.mrb[0].mxu0 %v185
    %v235 = vpop.f32.mrb[0].mxu0
    %v236 = vadd.f32 %v166, %v235
    %v237 = vpop.f32.mrb[0].mxu0
    %v238 = vpop.f32.mrb[0].mxu0
    %v239 = vadd.f32 %v166, %v238
    %v240 = vpop.f32.mrb[0].mxu0
    %241 = vmatprep.mubr.bf16.mxu0 0
    %242 = vmatmul.mubr.bf16.gmra.mrb[0].mxu0 %v188
    %v243 = vpop.f32.mrb[0].mxu0
    %v244 = vadd.f32 %v166, %v243
    %v245 = vpop.f32.mrb[0].mxu0
    %v246 = vpop.f32.mrb[0].mxu0
    %v247 = vadd.f32 %v166, %v246
    %v248 = vpop.f32.mrb[0].mxu0
    %249 = vmatprep.mubr.bf16.mxu0 0
    %250 = vmatmul.mubr.bf16.gmra.mrb[0].mxu0 %v191
    %v251 = vpop.f32.mrb[0].mxu0
    %v252 = vadd.f32 %v166, %v251
    %v253 = vpop.f32.mrb[0].mxu0
    %v254 = vpop.f32.mrb[0].mxu0
    %v255 = vadd.f32 %v166, %v254
    %v256 = vpop.f32.mrb[0].mxu0
    %257 = vdwg.mxu0
    %v258 = vld [vmem:[%s4] sm:$0xf]
    %v259 = vld [vmem:[%s4 + $0x4] sm:$0xf]
    %v260 = vld [vmem:[%s4 + $0x8] sm:$0xf]
    %v261 = vld [vmem:[%s4 + $0xc] sm:$0xf]
    %v262 = vld [vmem:[%s4 + $0x10] sm:$0xf]
    %v263 = vld [vmem:[%s4 + $0x14] sm:$0xf]
    %v264 = vld [vmem:[%s4 + $0x18] sm:$0xf]
    %v265 = vld [vmem:[%s4 + $0x1c] sm:$0xf]
    %v266 = vld [vmem:[%s4 + $0x20] sm:$0xf]
    %v267 = vld [vmem:[%s4 + $0x24] sm:$0xf]
    %v268 = vld [vmem:[%s4 + $0x28] sm:$0xf]
    %v269 = vld [vmem:[%s4 + $0x2c] sm:$0xf]
    %v270 = vld [vmem:[%s4 + $0x30] sm:$0xf]
    %v271 = vld [vmem:[%s4 + $0x34] sm:$0xf]
    %v272 = vld [vmem:[%s4 + $0x38] sm:$0xf]
    %v273 = vld [vmem:[%s4 + $0x3c] sm:$0xf]
    %v274 = vld [vmem:[%s2] sm:$0xff]
    %v275 = vmul.f32 %v274, 0.0
    %v276 = vpack.c.bf16 %v275, %v275
    %v293 = vunpack.c.l.b16 %v258
    %v294 = vunpack.c.l.b16 %v259
    %v295 = vunpack.c.l.b16 %v260
    %v296 = vunpack.c.l.b16 %v261
    %v297 = vunpack.c.l.b16 %v262
    %v298 = vunpack.c.l.b16 %v263
    %v299 = vunpack.c.l.b16 %v264
    %v300 = vunpack.c.l.b16 %v265
    %v301 = vunpack.c.l.b16 %v266
    %v302 = vunpack.c.l.b16 %v267
    %v303 = vunpack.c.l.b16 %v268
    %v304 = vunpack.c.l.b16 %v269
    %v305 = vunpack.c.l.b16 %v270
    %v306 = vunpack.c.l.b16 %v271
    %v307 = vunpack.c.l.b16 %v272
    %v308 = vunpack.c.l.b16 %v273
    %v309 = vpack.c.b16 %v294, %v293
    %v310 = vpack.c.b16 %v296, %v295
    %v311 = vpack.c.b16 %v298, %v297
    %v312 = vpack.c.b16 %v300, %v299
    %v313 = vpack.c.b16 %v302, %v301
    %v314 = vpack.c.b16 %v304, %v303
    %v315 = vpack.c.b16 %v306, %v305
    %v316 = vpack.c.b16 %v308, %v307
    %325 = vmatprep.subr.bf16.mxu0 0
    %326 = vmatpush1.bf16.msra.mxu0 %v309
    %327 = vmatprep.subr.bf16.mxu0 0
    %328 = vmatpush1.bf16.msra.mxu0 %v310
    %329 = vmatprep.subr.bf16.mxu0 0
    %330 = vmatpush1.bf16.msra.mxu0 %v311
    %331 = vmatprep.subr.bf16.mxu0 0
    %332 = vmatpush1.bf16.msra.mxu0 %v312
    %333 = vmatprep.subr.bf16.mxu0 0
    %334 = vmatpush1.bf16.msra.mxu0 %v313
    %335 = vmatprep.subr.bf16.mxu0 0
    %336 = vmatpush1.bf16.msra.mxu0 %v314
    %337 = vmatprep.subr.bf16.mxu0 0
    %338 = vmatpush1.bf16.msra.mxu0 %v315
    %339 = vmatprep.subr.bf16.mxu0 0
    %340 = vmatpush1.bf16.msra.mxu0 %v316
    %341 = vmatprep.subr.bf16.mxu0 0
    %342 = vmatpush1.bf16.msra.mxu0 0
    %343 = vmatprep.subr.bf16.mxu0 0
    %344 = vmatpush1.bf16.msra.mxu0 0
    %345 = vmatprep.subr.bf16.mxu0 0
    %346 = vmatpush1.bf16.msra.mxu0 0
    %347 = vmatprep.subr.bf16.mxu0 0
    %348 = vmatpush1.bf16.msra.mxu0 0
    %349 = vmatprep.subr.bf16.mxu0 0
    %350 = vmatpush1.bf16.msra.mxu0 0
    %351 = vmatprep.subr.bf16.mxu0 0
    %352 = vmatpush1.bf16.msra.mxu0 0
    %353 = vmatprep.subr.bf16.mxu0 0
    %354 = vmatpush1.bf16.msra.mxu0 0
    %355 = vmatprep.subr.bf16.mxu0 0
    %356 = vmatpush1.bf16.msra.mxu0 0
    %357 = vmatprep.mubr.bf16.mxu0 0
    %358 = vmatmul.mubr.bf16.gmra.mrb[0].mxu0 %v276
    %v359 = vpop.f32.mrb[0].mxu0
    %v360 = vadd.f32 0.0, %v359
    %v361 = vpop.f32.mrb[0].mxu0
    %v362 = vpop.f32.mrb[0].mxu0
    %v363 = vpop.f32.mrb[0].mxu0
    %364 = vdwg.mxu0
    %v365 = vadd.f32 %v228, %v360
    %v366 = vxor.u32 %v365, 2147483648
    %v367 = vmul.f32 %v366, 1.442695
    %v368 = vpow.pop %v367
    %v369 = vadd.f32 %v368, 1.0
    %v370 = vrcp.pop %v369
    %v371 = vmul.f32 1.0, %v370
    %v372 = vtanh.pop %v365
    %v373 = vmul.f32 %v371, 0.0
    %375 = vrot.lane.b32.xlu0 %v372, 32
    %v376 = vpop.permute.xlu0 %375
    %v378 = vmul.f32 %v371, %v376
    %380 = vrot.lane.b32.xlu0 %v378, 32
    %v381 = vpop.permute.xlu0 %380
    %v383 = vadd.f32 %v373, %v381
    %v384 = vtanh.pop %v383
    %386 = vrot.lane.b32.xlu0 %v384, 32
    %v387 = vpop.permute.xlu0 %386
    %v389 = vmul.f32 %v371, %v387
    %391 = vrot.lane.b32.xlu0 %v389, 64
    %v392 = vpop.permute.xlu0 %391
    %394 = vrot.lane.b32.xlu0 %v389, 96
    %v395 = vpop.permute.xlu0 %394
    %397 = vrot.lane.b32.xlu0 %v389, 32
    %v398 = vpop.permute.xlu0 %397
    %v400 = vsel %vm180, %v392, %v395
    %vm401 = vcmask 523264
    %v402 = vsel %vm401, %v400, %v389
    %vm403 = vcmask 785408
    %v404 = vsel %vm403, %v402, %v398
    %v405 = vmul.f32 %v404, %v274
    %v406 = vpack.c.bf16 %v405, %v405
    %407 = vmatprep.subr.bf16.mxu0 0
    %408 = vmatpush1.bf16.msra.mxu0 %v309
    %409 = vmatprep.subr.bf16.mxu0 0
    %410 = vmatpush1.bf16.msra.mxu0 %v310
    %411 = vmatprep.subr.bf16.mxu0 0
    %412 = vmatpush1.bf16.msra.mxu0 %v311
    %413 = vmatprep.subr.bf16.mxu0 0
    %414 = vmatpush1.bf16.msra.mxu0 %v312
    %415 = vmatprep.subr.bf16.mxu0 0
    %416 = vmatpush1.bf16.msra.mxu0 %v313
    %417 = vmatprep.subr.bf16.mxu0 0
    %418 = vmatpush1.bf16.msra.mxu0 %v314
    %419 = vmatprep.subr.bf16.mxu0 0
    %420 = vmatpush1.bf16.msra.mxu0 %v315
    %421 = vmatprep.subr.bf16.mxu0 0
    %422 = vmatpush1.bf16.msra.mxu0 %v316
    %423 = vmatprep.subr.bf16.mxu0 0
    %424 = vmatpush1.bf16.msra.mxu0 0
    %425 = vmatprep.subr.bf16.mxu0 0
    %426 = vmatpush1.bf16.msra.mxu0 0
    %427 = vmatprep.subr.bf16.mxu0 0
    %428 = vmatpush1.bf16.msra.mxu0 0
    %429 = vmatprep.subr.bf16.mxu0 0
    %430 = vmatpush1.bf16.msra.mxu0 0
    %431 = vmatprep.subr.bf16.mxu0 0
    %432 = vmatpush1.bf16.msra.mxu0 0
    %433 = vmatprep.subr.bf16.mxu0 0
    %434 = vmatpush1.bf16.msra.mxu0 0
    %435 = vmatprep.subr.bf16.mxu0 0
    %436 = vmatpush1.bf16.msra.mxu0 0
    %437 = vmatprep.subr.bf16.mxu0 0
    %438 = vmatpush1.bf16.msra.mxu0 0
    %439 = vmatprep.mubr.bf16.mxu0 0
    %440 = vmatmul.mubr.bf16.gmra.mrb[0].mxu0 %v406
    %v441 = vpop.f32.mrb[0].mxu0
    %v442 = vadd.f32 0.0, %v441
    %v443 = vpop.f32.mrb[0].mxu0
    %v444 = vpop.f32.mrb[0].mxu0
    %v445 = vpop.f32.mrb[0].mxu0
    %446 = vdwg.mxu0
    %v447 = vadd.f32 %v231, %v442
    %v448 = vxor.u32 %v447, 2147483648
    %v449 = vmul.f32 %v448, 1.442695
    %v450 = vpow.pop %v449
    %v451 = vadd.f32 %v450, 1.0
    %v452 = vrcp.pop %v451
    %v453 = vmul.f32 1.0, %v452
    %v454 = vtanh.pop %v447
    %v455 = vmul.f32 %v453, %v383
    %457 = vrot.lane.b32.xlu0 %v454, 32
    %v458 = vpop.permute.xlu0 %457
    %v460 = vmul.f32 %v453, %v458
    %462 = vrot.lane.b32.xlu0 %v460, 32
    %v463 = vpop.permute.xlu0 %462
    %v465 = vadd.f32 %v455, %v463
    %v466 = vtanh.pop %v465
    %468 = vrot.lane.b32.xlu0 %v466, 32
    %v469 = vpop.permute.xlu0 %468
    %v471 = vmul.f32 %v453, %v469
    %473 = vrot.lane.b32.xlu0 %v471, 64
    %v474 = vpop.permute.xlu0 %473
    %476 = vrot.lane.b32.xlu0 %v471, 96
    %v477 = vpop.permute.xlu0 %476
    %479 = vrot.lane.b32.xlu0 %v471, 32
    %v480 = vpop.permute.xlu0 %479
    %v482 = vsel %vm180, %v474, %v477
    %v483 = vsel %vm401, %v482, %v471
    %v484 = vsel %vm403, %v483, %v480
    %v485 = vmul.f32 %v484, %v274
    %v486 = vpack.c.bf16 %v485, %v485
    %487 = vmatprep.subr.bf16.mxu0 0
    %488 = vmatpush1.bf16.msra.mxu0 %v309
    %489 = vmatprep.subr.bf16.mxu0 0
    %490 = vmatpush1.bf16.msra.mxu0 %v310
    %491 = vmatprep.subr.bf16.mxu0 0
    %492 = vmatpush1.bf16.msra.mxu0 %v311
    %493 = vmatprep.subr.bf16.mxu0 0
    %494 = vmatpush1.bf16.msra.mxu0 %v312
    %495 = vmatprep.subr.bf16.mxu0 0
    %496 = vmatpush1.bf16.msra.mxu0 %v313
    %497 = vmatprep.subr.bf16.mxu0 0
    %498 = vmatpush1.bf16.msra.mxu0 %v314
    %499 = vmatprep.subr.bf16.mxu0 0
    %500 = vmatpush1.bf16.msra.mxu0 %v315
    %501 = vmatprep.subr.bf16.mxu0 0
    %502 = vmatpush1.bf16.msra.mxu0 %v316
    %503 = vmatprep.subr.bf16.mxu0 0
    %504 = vmatpush1.bf16.msra.mxu0 0
    %505 = vmatprep.subr.bf16.mxu0 0
    %506 = vmatpush1.bf16.msra.mxu0 0
    %507 = vmatprep.subr.bf16.mxu0 0
    %508 = vmatpush1.bf16.msra.mxu0 0
    %509 = vmatprep.subr.bf16.mxu0 0
    %510 = vmatpush1.bf16.msra.mxu0 0
    %511 = vmatprep.subr.bf16.mxu0 0
    %512 = vmatpush1.bf16.msra.mxu0 0
    %513 = vmatprep.subr.bf16.mxu0 0
    %514 = vmatpush1.bf16.msra.mxu0 0
    %515 = vmatprep.subr.bf16.mxu0 0
    %516 = vmatpush1.bf16.msra.mxu0 0
    %517 = vmatprep.subr.bf16.mxu0 0
    %518 = vmatpush1.bf16.msra.mxu0 0
    %519 = vmatprep.mubr.bf16.mxu0 0
    %520 = vmatmul.mubr.bf16.gmra.mrb[0].mxu0 %v486
    %v521 = vpop.f32.mrb[0].mxu0
    %v522 = vadd.f32 0.0, %v521
    %v523 = vpop.f32.mrb[0].mxu0
    %v524 = vpop.f32.mrb[0].mxu0
    %v525 = vpop.f32.mrb[0].mxu0
    %526 = vdwg.mxu0
    %v527 = vadd.f32 %v236, %v522
    %v528 = vxor.u32 %v527, 2147483648
    %v529 = vmul.f32 %v528, 1.442695
    %v530 = vpow.pop %v529
    %v531 = vadd.f32 %v530, 1.0
    %v532 = vrcp.pop %v531
    %v533 = vmul.f32 1.0, %v532
    %v534 = vtanh.pop %v527
    %v535 = vmul.f32 %v533, %v465
    %537 = vrot.lane.b32.xlu0 %v534, 32
    %v538 = vpop.permute.xlu0 %537
    %v540 = vmul.f32 %v533, %v538
    %542 = vrot.lane.b32.xlu0 %v540, 32
    %v543 = vpop.permute.xlu0 %542
    %v545 = vadd.f32 %v535, %v543
    %v546 = vtanh.pop %v545
    %548 = vrot.lane.b32.xlu0 %v546, 32
    %v549 = vpop.permute.xlu0 %548
    %v551 = vmul.f32 %v533, %v549
    %553 = vrot.lane.b32.xlu0 %v551, 64
    %v554 = vpop.permute.xlu0 %553
    %556 = vrot.lane.b32.xlu0 %v551, 96
    %v557 = vpop.permute.xlu0 %556
    %559 = vrot.lane.b32.xlu0 %v551, 32
    %v560 = vpop.permute.xlu0 %559
    %v562 = vsel %vm180, %v554, %v557
    %v563 = vsel %vm401, %v562, %v551
    %v564 = vsel %vm403, %v563, %v560
    %v565 = vmul.f32 %v564, %v274
    %v566 = vpack.c.bf16 %v565, %v565
    %567 = vmatprep.subr.bf16.mxu0 0
    %568 = vmatpush1.bf16.msra.mxu0 %v309
    %569 = vmatprep.subr.bf16.mxu0 0
    %570 = vmatpush1.bf16.msra.mxu0 %v310
    %571 = vmatprep.subr.bf16.mxu0 0
    %572 = vmatpush1.bf16.msra.mxu0 %v311
    %573 = vmatprep.subr.bf16.mxu0 0
    %574 = vmatpush1.bf16.msra.mxu0 %v312
    %575 = vmatprep.subr.bf16.mxu0 0
    %576 = vmatpush1.bf16.msra.mxu0 %v313
    %577 = vmatprep.subr.bf16.mxu0 0
    %578 = vmatpush1.bf16.msra.mxu0 %v314
    %579 = vmatprep.subr.bf16.mxu0 0
    %580 = vmatpush1.bf16.msra.mxu0 %v315
    %581 = vmatprep.subr.bf16.mxu0 0
    %582 = vmatpush1.bf16.msra.mxu0 %v316
    %583 = vmatprep.subr.bf16.mxu0 0
    %584 = vmatpush1.bf16.msra.mxu0 0
    %585 = vmatprep.subr.bf16.mxu0 0
    %586 = vmatpush1.bf16.msra.mxu0 0
    %587 = vmatprep.subr.bf16.mxu0 0
    %588 = vmatpush1.bf16.msra.mxu0 0
    %589 = vmatprep.subr.bf16.mxu0 0
    %590 = vmatpush1.bf16.msra.mxu0 0
    %591 = vmatprep.subr.bf16.mxu0 0
    %592 = vmatpush1.bf16.msra.mxu0 0
    %593 = vmatprep.subr.bf16.mxu0 0
    %594 = vmatpush1.bf16.msra.mxu0 0
    %595 = vmatprep.subr.bf16.mxu0 0
    %596 = vmatpush1.bf16.msra.mxu0 0
    %597 = vmatprep.subr.bf16.mxu0 0
    %598 = vmatpush1.bf16.msra.mxu0 0
    %599 = vmatprep.mubr.bf16.mxu0 0
    %600 = vmatmul.mubr.bf16.gmra.mrb[0].mxu0 %v566
    %v601 = vpop.f32.mrb[0].mxu0
    %v602 = vadd.f32 0.0, %v601
    %v603 = vpop.f32.mrb[0].mxu0
    %v604 = vpop.f32.mrb[0].mxu0
    %v605 = vpop.f32.mrb[0].mxu0
    %606 = vdwg.mxu0
    %v607 = vadd.f32 %v239, %v602
    %v608 = vxor.u32 %v607, 2147483648
    %v609 = vmul.f32 %v608, 1.442695
    %v610 = vpow.pop %v609
    %v611 = vadd.f32 %v610, 1.0
    %v612 = vrcp.pop %v611
    %v613 = vmul.f32 1.0, %v612
    %v614 = vtanh.pop %v607
    %v615 = vmul.f32 %v613, %v545
    %617 = vrot.lane.b32.xlu0 %v614, 32
    %v618 = vpop.permute.xlu0 %617
    %v620 = vmul.f32 %v613, %v618
    %622 = vrot.lane.b32.xlu0 %v620, 32
    %v623 = vpop.permute.xlu0 %622
    %v625 = vadd.f32 %v615, %v623
    %v626 = vtanh.pop %v625
    %628 = vrot.lane.b32.xlu0 %v626, 32
    %v629 = vpop.permute.xlu0 %628
    %v631 = vmul.f32 %v613, %v629
    %633 = vrot.lane.b32.xlu0 %v631, 32
    %v634 = vpop.permute.xlu0 %633
    %v636 = vsel %vm180, %v392, %v477
    %v637 = vsel %vm401, %v636, %v551
    %v638 = vsel %vm403, %v637, %v634
    %639 = vst [vmem:[%s6] sm:$0xff] %v638
    %640 = vrot.lane.b32.xlu0 %v631, 64
    %v641 = vpop.permute.xlu0 %640
    %643 = vrot.lane.b32.xlu0 %v631, 96
    %v644 = vpop.permute.xlu0 %643
    %v646 = vsel %vm180, %v641, %v644
    %v647 = vsel %vm401, %v646, %v631
    %v648 = vsel %vm403, %v647, %v634
    %v649 = vmul.f32 %v648, %v274
    %v650 = vpack.c.bf16 %v649, %v649
    %651 = vmatprep.subr.bf16.mxu0 0
    %652 = vmatpush1.bf16.msra.mxu0 %v309
    %653 = vmatprep.subr.bf16.mxu0 0
    %654 = vmatpush1.bf16.msra.mxu0 %v310
    %655 = vmatprep.subr.bf16.mxu0 0
    %656 = vmatpush1.bf16.msra.mxu0 %v311
    %657 = vmatprep.subr.bf16.mxu0 0
    %658 = vmatpush1.bf16.msra.mxu0 %v312
    %659 = vmatprep.subr.bf16.mxu0 0
    %660 = vmatpush1.bf16.msra.mxu0 %v313
    %661 = vmatprep.subr.bf16.mxu0 0
    %662 = vmatpush1.bf16.msra.mxu0 %v314
    %663 = vmatprep.subr.bf16.mxu0 0
    %664 = vmatpush1.bf16.msra.mxu0 %v315
    %665 = vmatprep.subr.bf16.mxu0 0
    %666 = vmatpush1.bf16.msra.mxu0 %v316
    %667 = vmatprep.subr.bf16.mxu0 0
    %668 = vmatpush1.bf16.msra.mxu0 0
    %669 = vmatprep.subr.bf16.mxu0 0
    %670 = vmatpush1.bf16.msra.mxu0 0
    %671 = vmatprep.subr.bf16.mxu0 0
    %672 = vmatpush1.bf16.msra.mxu0 0
    %673 = vmatprep.subr.bf16.mxu0 0
    %674 = vmatpush1.bf16.msra.mxu0 0
    %675 = vmatprep.subr.bf16.mxu0 0
    %676 = vmatpush1.bf16.msra.mxu0 0
    %677 = vmatprep.subr.bf16.mxu0 0
    %678 = vmatpush1.bf16.msra.mxu0 0
    %679 = vmatprep.subr.bf16.mxu0 0
    %680 = vmatpush1.bf16.msra.mxu0 0
    %681 = vmatprep.subr.bf16.mxu0 0
    %682 = vmatpush1.bf16.msra.mxu0 0
    %683 = vmatprep.mubr.bf16.mxu0 0
    %684 = vmatmul.mubr.bf16.gmra.mrb[0].mxu0 %v650
    %v685 = vpop.f32.mrb[0].mxu0
    %v686 = vadd.f32 0.0, %v685
    %v687 = vpop.f32.mrb[0].mxu0
    %v688 = vpop.f32.mrb[0].mxu0
    %v689 = vpop.f32.mrb[0].mxu0
    %690 = vdwg.mxu0
    %v691 = vadd.f32 %v244, %v686
    %v692 = vxor.u32 %v691, 2147483648
    %v693 = vmul.f32 %v692, 1.442695
    %v694 = vpow.pop %v693
    %v695 = vadd.f32 %v694, 1.0
    %v696 = vrcp.pop %v695
    %v697 = vmul.f32 1.0, %v696
    %v698 = vtanh.pop %v691
    %v699 = vmul.f32 %v697, %v625
    %701 = vrot.lane.b32.xlu0 %v698, 32
    %v702 = vpop.permute.xlu0 %701
    %v704 = vmul.f32 %v697, %v702
    %706 = vrot.lane.b32.xlu0 %v704, 32
    %v707 = vpop.permute.xlu0 %706
    %v709 = vadd.f32 %v699, %v707
    %v710 = vtanh.pop %v709
    %712 = vrot.lane.b32.xlu0 %v710, 32
    %v713 = vpop.permute.xlu0 %712
    %v715 = vmul.f32 %v697, %v713
    %717 = vrot.lane.b32.xlu0 %v715, 64
    %v718 = vpop.permute.xlu0 %717
    %720 = vrot.lane.b32.xlu0 %v715, 96
    %v721 = vpop.permute.xlu0 %720
    %723 = vrot.lane.b32.xlu0 %v715, 32
    %v724 = vpop.permute.xlu0 %723
    %v726 = vsel %vm180, %v718, %v721
    %v727 = vsel %vm401, %v726, %v715
    %v728 = vsel %vm403, %v727, %v724
    %v729 = vmul.f32 %v728, %v274
    %v730 = vpack.c.bf16 %v729, %v729
    %731 = vmatprep.subr.bf16.mxu0 0
    %732 = vmatpush1.bf16.msra.mxu0 %v309
    %733 = vmatprep.subr.bf16.mxu0 0
    %734 = vmatpush1.bf16.msra.mxu0 %v310
    %735 = vmatprep.subr.bf16.mxu0 0
    %736 = vmatpush1.bf16.msra.mxu0 %v311
    %737 = vmatprep.subr.bf16.mxu0 0
    %738 = vmatpush1.bf16.msra.mxu0 %v312
    %739 = vmatprep.subr.bf16.mxu0 0
    %740 = vmatpush1.bf16.msra.mxu0 %v313
    %741 = vmatprep.subr.bf16.mxu0 0
    %742 = vmatpush1.bf16.msra.mxu0 %v314
    %743 = vmatprep.subr.bf16.mxu0 0
    %744 = vmatpush1.bf16.msra.mxu0 %v315
    %745 = vmatprep.subr.bf16.mxu0 0
    %746 = vmatpush1.bf16.msra.mxu0 %v316
    %747 = vmatprep.subr.bf16.mxu0 0
    %748 = vmatpush1.bf16.msra.mxu0 0
    %749 = vmatprep.subr.bf16.mxu0 0
    %750 = vmatpush1.bf16.msra.mxu0 0
    %751 = vmatprep.subr.bf16.mxu0 0
    %752 = vmatpush1.bf16.msra.mxu0 0
    %753 = vmatprep.subr.bf16.mxu0 0
    %754 = vmatpush1.bf16.msra.mxu0 0
    %755 = vmatprep.subr.bf16.mxu0 0
    %756 = vmatpush1.bf16.msra.mxu0 0
    %757 = vmatprep.subr.bf16.mxu0 0
    %758 = vmatpush1.bf16.msra.mxu0 0
    %759 = vmatprep.subr.bf16.mxu0 0
    %760 = vmatpush1.bf16.msra.mxu0 0
    %761 = vmatprep.subr.bf16.mxu0 0
    %762 = vmatpush1.bf16.msra.mxu0 0
    %763 = vmatprep.mubr.bf16.mxu0 0
    %764 = vmatmul.mubr.bf16.gmra.mrb[0].mxu0 %v730
    %v765 = vpop.f32.mrb[0].mxu0
    %v766 = vadd.f32 0.0, %v765
    %v767 = vpop.f32.mrb[0].mxu0
    %v768 = vpop.f32.mrb[0].mxu0
    %v769 = vpop.f32.mrb[0].mxu0
    %770 = vdwg.mxu0
    %v771 = vadd.f32 %v247, %v766
    %v772 = vxor.u32 %v771, 2147483648
    %v773 = vmul.f32 %v772, 1.442695
    %v774 = vpow.pop %v773
    %v775 = vadd.f32 %v774, 1.0
    %v776 = vrcp.pop %v775
    %v777 = vmul.f32 1.0, %v776
    %v778 = vtanh.pop %v771
    %v779 = vmul.f32 %v777, %v709
    %781 = vrot.lane.b32.xlu0 %v778, 32
    %v782 = vpop.permute.xlu0 %781
    %v784 = vmul.f32 %v777, %v782
    %786 = vrot.lane.b32.xlu0 %v784, 32
    %v787 = vpop.permute.xlu0 %786
    %v789 = vadd.f32 %v779, %v787
    %v790 = vtanh.pop %v789
    %792 = vrot.lane.b32.xlu0 %v790, 32
    %v793 = vpop.permute.xlu0 %792
    %v795 = vmul.f32 %v777, %v793
    %797 = vrot.lane.b32.xlu0 %v795, 64
    %v798 = vpop.permute.xlu0 %797
    %800 = vrot.lane.b32.xlu0 %v795, 96
    %v801 = vpop.permute.xlu0 %800
    %803 = vrot.lane.b32.xlu0 %v795, 32
    %v804 = vpop.permute.xlu0 %803
    %v806 = vsel %vm180, %v798, %v801
    %v807 = vsel %vm401, %v806, %v795
    %v808 = vsel %vm403, %v807, %v804
    %v809 = vmul.f32 %v808, %v274
    %v810 = vpack.c.bf16 %v809, %v809
    %811 = vmatprep.subr.bf16.mxu0 0
    %812 = vmatpush1.bf16.msra.mxu0 %v309
    %813 = vmatprep.subr.bf16.mxu0 0
    %814 = vmatpush1.bf16.msra.mxu0 %v310
    %815 = vmatprep.subr.bf16.mxu0 0
    %816 = vmatpush1.bf16.msra.mxu0 %v311
    %817 = vmatprep.subr.bf16.mxu0 0
    %818 = vmatpush1.bf16.msra.mxu0 %v312
    %819 = vmatprep.subr.bf16.mxu0 0
    %820 = vmatpush1.bf16.msra.mxu0 %v313
    %821 = vmatprep.subr.bf16.mxu0 0
    %822 = vmatpush1.bf16.msra.mxu0 %v314
    %823 = vmatprep.subr.bf16.mxu0 0
    %824 = vmatpush1.bf16.msra.mxu0 %v315
    %825 = vmatprep.subr.bf16.mxu0 0
    %826 = vmatpush1.bf16.msra.mxu0 %v316
    %827 = vmatprep.subr.bf16.mxu0 0
    %828 = vmatpush1.bf16.msra.mxu0 0
    %829 = vmatprep.subr.bf16.mxu0 0
    %830 = vmatpush1.bf16.msra.mxu0 0
    %831 = vmatprep.subr.bf16.mxu0 0
    %832 = vmatpush1.bf16.msra.mxu0 0
    %833 = vmatprep.subr.bf16.mxu0 0
    %834 = vmatpush1.bf16.msra.mxu0 0
    %835 = vmatprep.subr.bf16.mxu0 0
    %836 = vmatpush1.bf16.msra.mxu0 0
    %837 = vmatprep.subr.bf16.mxu0 0
    %838 = vmatpush1.bf16.msra.mxu0 0
    %839 = vmatprep.subr.bf16.mxu0 0
    %840 = vmatpush1.bf16.msra.mxu0 0
    %841 = vmatprep.subr.bf16.mxu0 0
    %842 = vmatpush1.bf16.msra.mxu0 0
    %843 = vmatprep.mubr.bf16.mxu0 0
    %844 = vmatmul.mubr.bf16.gmra.mrb[0].mxu0 %v810
    %v845 = vpop.f32.mrb[0].mxu0
    %v846 = vadd.f32 0.0, %v845
    %v847 = vpop.f32.mrb[0].mxu0
    %v848 = vpop.f32.mrb[0].mxu0
    %v849 = vpop.f32.mrb[0].mxu0
    %850 = vdwg.mxu0
    %v851 = vadd.f32 %v252, %v846
    %v852 = vxor.u32 %v851, 2147483648
    %v853 = vmul.f32 %v852, 1.442695
    %v854 = vpow.pop %v853
    %v855 = vadd.f32 %v854, 1.0
    %v856 = vrcp.pop %v855
    %v857 = vmul.f32 1.0, %v856
    %v858 = vtanh.pop %v851
    %v859 = vmul.f32 %v857, %v789
    %861 = vrot.lane.b32.xlu0 %v858, 32
    %v862 = vpop.permute.xlu0 %861
    %v864 = vmul.f32 %v857, %v862
    %866 = vrot.lane.b32.xlu0 %v864, 32
    %v867 = vpop.permute.xlu0 %866
    %v869 = vadd.f32 %v859, %v867
    %v870 = vtanh.pop %v869
    %872 = vrot.lane.b32.xlu0 %v870, 32
    %v873 = vpop.permute.xlu0 %872
    %v875 = vmul.f32 %v857, %v873
    %877 = vrot.lane.b32.xlu0 %v875, 64
    %v878 = vpop.permute.xlu0 %877
    %880 = vrot.lane.b32.xlu0 %v875, 96
    %v881 = vpop.permute.xlu0 %880
    %883 = vrot.lane.b32.xlu0 %v875, 32
    %v884 = vpop.permute.xlu0 %883
    %v886 = vsel %vm180, %v878, %v881
    %v887 = vsel %vm401, %v886, %v875
    %v888 = vsel %vm403, %v887, %v884
    %v889 = vmul.f32 %v888, %v274
    %v890 = vpack.c.bf16 %v889, %v889
    %891 = vmatprep.subr.bf16.mxu0 0
    %892 = vmatpush1.bf16.msra.mxu0 %v309
    %893 = vmatprep.subr.bf16.mxu0 0
    %894 = vmatpush1.bf16.msra.mxu0 %v310
    %895 = vmatprep.subr.bf16.mxu0 0
    %896 = vmatpush1.bf16.msra.mxu0 %v311
    %897 = vmatprep.subr.bf16.mxu0 0
    %898 = vmatpush1.bf16.msra.mxu0 %v312
    %899 = vmatprep.subr.bf16.mxu0 0
    %900 = vmatpush1.bf16.msra.mxu0 %v313
    %901 = vmatprep.subr.bf16.mxu0 0
    %902 = vmatpush1.bf16.msra.mxu0 %v314
    %903 = vmatprep.subr.bf16.mxu0 0
    %904 = vmatpush1.bf16.msra.mxu0 %v315
    %905 = vmatprep.subr.bf16.mxu0 0
    %906 = vmatpush1.bf16.msra.mxu0 %v316
    %907 = vmatprep.subr.bf16.mxu0 0
    %908 = vmatpush1.bf16.msra.mxu0 0
    %909 = vmatprep.subr.bf16.mxu0 0
    %910 = vmatpush1.bf16.msra.mxu0 0
    %911 = vmatprep.subr.bf16.mxu0 0
    %912 = vmatpush1.bf16.msra.mxu0 0
    %913 = vmatprep.subr.bf16.mxu0 0
    %914 = vmatpush1.bf16.msra.mxu0 0
    %915 = vmatprep.subr.bf16.mxu0 0
    %916 = vmatpush1.bf16.msra.mxu0 0
    %917 = vmatprep.subr.bf16.mxu0 0
    %918 = vmatpush1.bf16.msra.mxu0 0
    %919 = vmatprep.subr.bf16.mxu0 0
    %920 = vmatpush1.bf16.msra.mxu0 0
    %921 = vmatprep.subr.bf16.mxu0 0
    %922 = vmatpush1.bf16.msra.mxu0 0
    %923 = vmatprep.mubr.bf16.mxu0 0
    %924 = vmatmul.mubr.bf16.gmra.mrb[0].mxu0 %v890
    %v925 = vpop.f32.mrb[0].mxu0
    %v926 = vadd.f32 0.0, %v925
    %v927 = vpop.f32.mrb[0].mxu0
    %v928 = vpop.f32.mrb[0].mxu0
    %v929 = vpop.f32.mrb[0].mxu0
    %930 = vdwg.mxu0
    %v931 = vadd.f32 %v255, %v926
    %v932 = vxor.u32 %v931, 2147483648
    %v933 = vmul.f32 %v932, 1.442695
    %v934 = vpow.pop %v933
    %v935 = vadd.f32 %v934, 1.0
    %v936 = vrcp.pop %v935
    %v937 = vmul.f32 1.0, %v936
    %v938 = vtanh.pop %v931
    %v939 = vmul.f32 %v937, %v869
    %941 = vrot.lane.b32.xlu0 %v938, 32
    %v942 = vpop.permute.xlu0 %941
    %v944 = vmul.f32 %v937, %v942
    %946 = vrot.lane.b32.xlu0 %v944, 32
    %v947 = vpop.permute.xlu0 %946
    %v949 = vadd.f32 %v939, %v947
    %v950 = vtanh.pop %v949
    %952 = vrot.lane.b32.xlu0 %v950, 32
    %v953 = vpop.permute.xlu0 %952
    %v955 = vmul.f32 %v937, %v953
    %957 = vrot.lane.b32.xlu0 %v955, 32
    %v958 = vpop.permute.xlu0 %957
    %v960 = vsel %vm180, %v718, %v801
    %v961 = vsel %vm401, %v960, %v875
    %v962 = vsel %vm403, %v961, %v958
    %963 = vst [vmem:[%s6 + $0x8] sm:$0xff] %v962
    %964 = vrot.lane.b32.xlu0 %v955, 64
    %v965 = vpop.permute.xlu0 %964
    %967 = vst.msk [vmem:[#allocation2] sm:$0xff] %vm180, %v965
    %969 = vrot.lane.b32.xlu0 %v949, 96
    %v970 = vpop.permute.xlu0 %969
    %972 = vst.msk [vmem:[#allocation4] sm:$0xff] %vm180, %v970
    // Predicated region
    $region26: #{stochastic_lstm_cell_forward.1} parent=1 // pred_check
      _
    $region27: #{stochastic_lstm_cell_forward.1} parent=1 // pred_check_branch
      %974 = sbr.rel (0) target = $region29
    $region28: #{stochastic_lstm_cell_forward.1} parent=1 // pred_region
      _
    $region29: #{stochastic_lstm_cell_forward.1} parent=1 // pred_fallthru
      _
    // Predicated region
    $region30: #{stochastic_lstm_cell_forward.1} parent=1 // pred_check
      _
    $region31: #{stochastic_lstm_cell_forward.1} parent=1 // pred_check_branch
      %976 = sbr.rel (0) target = $region33
    $region32: #{stochastic_lstm_cell_forward.1} parent=1 // pred_region
      %s978 = ssub.s32 128, 128
      %979 = vsyncadd [#allocation3], %s978
      %s981 = sshll.u32 [#allocation2], 4
      %s982 = int_to_ptr.vmem [resolvable:$true] %s981
      %984 = dma.vmem_to_hbm [thread:$0]  %s982, 128, %s7, [#allocation3]
    $region33: #{stochastic_lstm_cell_forward.1} parent=1 // pred_fallthru
      _
    // Predicated region
    $region34: #{stochastic_lstm_cell_forward.1} parent=1 // pred_check
      _
    $region35: #{stochastic_lstm_cell_forward.1} parent=1 // pred_check_branch
      %986 = sbr.rel (0) target = $region37
    $region36: #{stochastic_lstm_cell_forward.1} parent=1 // pred_region
      %s988 = ssub.s32 128, 128
      %989 = vsyncadd [#allocation5], %s988
      %s991 = sshll.u32 [#allocation4], 4
      %s992 = int_to_ptr.vmem [resolvable:$true] %s991
      %994 = dma.vmem_to_hbm [thread:$0]  %s992, 128, %s8, [#allocation5]
    $region37: #{stochastic_lstm_cell_forward.1} parent=1 // pred_fallthru
      _
    // Predicated region
    $region38: #{stochastic_lstm_cell_forward.1} parent=1 // pred_check
      _
    $region39: #{stochastic_lstm_cell_forward.1} parent=1 // pred_check_branch
      %996 = sbr.rel (0) target = $region41
    $region40: #{stochastic_lstm_cell_forward.1} parent=1 // pred_region
      _
    $region41: #{stochastic_lstm_cell_forward.1} parent=1 // pred_fallthru
      _
    // Predicated region
    $region42: #{stochastic_lstm_cell_forward.1} parent=1 // pred_check
      _
    $region43: #{stochastic_lstm_cell_forward.1} parent=1 // pred_check_branch
      %998 = sbr.rel (0) target = $region45
    $region44: #{stochastic_lstm_cell_forward.1} parent=1 // pred_region
      %999 = dma.done [#allocation3], 128
    $region45: #{stochastic_lstm_cell_forward.1} parent=1 // pred_fallthru
      _
    // Predicated region
    $region46: #{stochastic_lstm_cell_forward.1} parent=1 // pred_check
      _
    $region47: #{stochastic_lstm_cell_forward.1} parent=1 // pred_check_branch
      %1001 = sbr.rel (0) target = $region49
    $region48: #{stochastic_lstm_cell_forward.1} parent=1 // pred_region
      %1002 = dma.done [#allocation5], 128
    $region49: #{stochastic_lstm_cell_forward.1} parent=1 // pred_fallthru
      _
    %1003 = vsyncpa [#allocation3], 1
    %1004 = vsyncpa [#allocation5], 1

</llo_original>
